<compile_context>
chip_gen: v7x
topology: tpu7x:2x2x1
jax: 0.10.0
libtpu: 0.0.40
codegen_flags: <defaults>
</compile_context>

<pallas_src>
import functools

import jax
import jax.numpy as jnp
from jax.experimental import pallas as pl
from jax.experimental.pallas import tpu as pltpu

_LANE = 128          # lane width: hidden / output feature dims padded to this
_SUBLANE_BF16 = 16   # bf16 sublane packing: batch / contraction dims padded to this


def _round_up(x, m):
    return ((x + m - 1) // m) * m


def mlp_kernel(x_ref, w1_ref, b1_ref, w2_ref, b2_ref, o_ref):
    # Layer 1: bf16 MXU matmul with f32 accumulation, f32 bias + ReLU on VPU.
    h = jnp.dot(x_ref[...], w1_ref[...],
                preferred_element_type=jnp.float32)          # (TB, n_units_p) f32
    h = jnp.maximum(h + b1_ref[...], 0.0)
    # Layer 2: cast back to bf16 for the MXU, accumulate f32, lane-dense store.
    y = jnp.dot(h.astype(w2_ref.dtype), w2_ref[...],
                preferred_element_type=jnp.float32)          # (TB, n_out_p) f32
    o_ref[...] = (y + b2_ref[...]).astype(o_ref.dtype)


def prepare_params(w1, b1, w2, b2):
    """Pad + cast the weights/biases ONCE (outside the per-batch hot path).

    w1: (n_in, n_units), b1: (n_units,), w2: (n_units, n_out), b2: (n_out,)
    Returns bf16 padded weights and f32 padded (1, dim) biases.
    Zero padding preserves the math exactly.
    """
    n_in, n_units = w1.shape
    n_out = w2.shape[1]
    n_in_p = _round_up(n_in, _SUBLANE_BF16)     # contraction dim: sublane-align only
    n_units_p = _round_up(n_units, _LANE)
    n_out_p = _round_up(n_out, _LANE)

    bf16, f32 = jnp.bfloat16, jnp.float32
    w1_p = jnp.pad(w1.astype(bf16), ((0, n_in_p - n_in), (0, n_units_p - n_units)))
    b1_p = jnp.pad(b1.reshape(1, -1).astype(f32), ((0, 0), (0, n_units_p - n_units)))
    w2_p = jnp.pad(w2.astype(bf16), ((0, n_units_p - n_units), (0, n_out_p - n_out)))
    b2_p = jnp.pad(b2.reshape(1, -1).astype(f32), ((0, 0), (0, n_out_p - n_out)))
    return w1_p, b1_p, w2_p, b2_p


@functools.partial(jax.jit, static_argnames=("n_out", "batch_tile"))
def neural_network_forward(x, w1_p, b1_p, w2_p, b2_p, *, n_out, batch_tile=512):
    """Pallas equivalent of NeuralNetwork.forward: l2(relu(l1(x))).

    x: (B, n_in) float; padded weights from prepare_params; n_out: true output dim.
    """
    B, n_in = x.shape
    n_in_p, n_units_p = w1_p.shape
    n_out_p = w2_p.shape[1]

    # One tile for the whole batch when it fits (grid=(1,)); otherwise split
    # into equal sublane-aligned batch tiles (each grid step ~0.35 us overhead).
    tb = min(batch_tile, _round_up(B, _SUBLANE_BF16))
    B_p = _round_up(B, tb)
    nb = B_p // tb

    # Per-call padding: only x (batch rows + contraction dim), cast to bf16.
    x_p = jnp.pad(x.astype(jnp.bfloat16), ((0, B_p - B), (0, n_in_p - n_in)))

    cost = pl.CostEstimate(
        flops=2 * B_p * (n_in_p * n_units_p + n_units_p * n_out_p),
        transcendentals=0,
        bytes_accessed=(x_p.size * 2 + w1_p.size * 2 + w2_p.size * 2
                        + b1_p.size * 4 + b2_p.size * 4 + B_p * n_out_p * 4),
    )

    y_p = pl.pallas_call(
        mlp_kernel,
        out_shape=jax.ShapeDtypeStruct((B_p, n_out_p), jnp.float32),
        grid=(nb,),
        in_specs=[
            # x: tiled along batch only.
            pl.BlockSpec((tb, n_in_p), lambda i: (i, 0)),
            # Weights / biases: constant block index -> VMEM-resident across tiles.
            pl.BlockSpec((n_in_p, n_units_p), lambda i: (0, 0)),
            pl.BlockSpec((1, n_units_p), lambda i: (0, 0)),
            pl.BlockSpec((n_units_p, n_out_p), lambda i: (0, 0)),
            pl.BlockSpec((1, n_out_p), lambda i: (0, 0)),
        ],
        out_specs=pl.BlockSpec((tb, n_out_p), lambda i: (i, 0)),
        compiler_params=pltpu.CompilerParams(
            dimension_semantics=("parallel",)),   # multi-tile batches split across TCs
        cost_estimate=cost,
    )(x_p, w1_p, b1_p, w2_p, b2_p)

    # Strip batch and lane padding (fused into the jitted graph).
    return y_p[:B, :n_out]


if __name__ == "__main__":
    # Module hyperparameters implied by the notebook: n_in=5, n_units=10, n_out=3.
    batch = 200          # non-multiple of the tile to exercise batch padding
    n_in = 5
    n_units = 10
    n_out = 3

    key = jax.random.PRNGKey(0)
    kx, kw1, kb1, kw2, kb2 = jax.random.split(key, 5)

    x = jax.random.normal(kx, (batch, n_in), dtype=jnp.float32)

    # PyTorch nn.Linear-style uniform init bounds (deterministic).
    bound1 = 1.0 / jnp.sqrt(n_in)
    w1 = jax.random.uniform(kw1, (n_in, n_units), jnp.float32, -bound1, bound1)
    b1 = jax.random.uniform(kb1, (n_units,), jnp.float32, -bound1, bound1)
    bound2 = 1.0 / jnp.sqrt(n_units)
    w2 = jax.random.uniform(kw2, (n_units, n_out), jnp.float32, -bound2, bound2)
    b2 = jax.random.uniform(kb2, (n_out,), jnp.float32, -bound2, bound2)

    # Pad/cast weights once; only x is processed per forward call.
    params = prepare_params(w1, b1, w2, b2)

    y = neural_network_forward(x, *params, n_out=n_out)
    jax.block_until_ready(y)

    # Correctness check against plain-JAX f32 reference (tolerance loosened for
    # bf16 MXU inputs with f32 accumulation).
    y_ref = jnp.maximum(x @ w1 + b1[None, :], 0.0) @ w2 + b2[None, :]
    assert y.shape == (batch, n_out)
    assert jnp.allclose(y, y_ref, atol=3e-2, rtol=3e-2), (
        float(jnp.max(jnp.abs(y - y_ref))))

    print("KERNEL_OK")
</pallas_src>

<mosaic_0001>
module attributes {stable_mosaic.version = 11 : i64} {
  func.func @mlp_kernel(%arg0: i32, %arg1: memref<208x16xbf16, #tpu.memory_space<vmem>>, %arg2: memref<16x128xbf16, #tpu.memory_space<vmem>>, %arg3: memref<1x128xf32, #tpu.memory_space<vmem>>, %arg4: memref<128x128xbf16, #tpu.memory_space<vmem>>, %arg5: memref<1x128xf32, #tpu.memory_space<vmem>>, %arg6: memref<208x128xf32, #tpu.memory_space<vmem>>) attributes {dimension_semantics = [#tpu.dimension_semantics<parallel>], iteration_bounds = array<i64: 1>, scalar_prefetch = 0 : i64, scratch_operands = 0 : i64, tpu.core_type = #tpu.core_type<tc>, window_params = [{transform_indices = @transform_0, window_bounds = array<i64: 208, 16>}, {pipeline_mode = #tpu.pipeline_mode<synchronous>, transform_indices = @transform_1, window_bounds = array<i64: 16, 128>}, {pipeline_mode = #tpu.pipeline_mode<synchronous>, transform_indices = @transform_2, window_bounds = array<i64: 1, 128>}, {pipeline_mode = #tpu.pipeline_mode<synchronous>, transform_indices = @transform_3, window_bounds = array<i64: 128, 128>}, {pipeline_mode = #tpu.pipeline_mode<synchronous>, transform_indices = @transform_4, window_bounds = array<i64: 1, 128>}, {transform_indices = @transform_5, window_bounds = array<i64: 208, 128>}]} {
    %c0 = arith.constant 0 : index
    %c0_0 = arith.constant 0 : index
    %0 = vector.load %arg1[%c0, %c0_0] : memref<208x16xbf16, #tpu.memory_space<vmem>>, vector<208x16xbf16>
    %c0_1 = arith.constant 0 : index
    %c0_2 = arith.constant 0 : index
    %1 = vector.load %arg2[%c0_1, %c0_2] : memref<16x128xbf16, #tpu.memory_space<vmem>>, vector<16x128xbf16>
    %cst = arith.constant dense<0.000000e+00> : vector<208x128xf32>
    %2 = tpu.matmul %0, %1, %cst {dimension_numbers = #tpu.dot_dimension_numbers<[1], [0], [0], [1], [0, 0, 1, 1], [], []>} : vector<208x16xbf16>, vector<16x128xbf16>, vector<208x128xf32> -> vector<208x128xf32>
    %c0_3 = arith.constant 0 : index
    %c0_4 = arith.constant 0 : index
    %3 = vector.load %arg3[%c0_3, %c0_4] : memref<1x128xf32, #tpu.memory_space<vmem>>, vector<1x128xf32>
    %4 = vector.broadcast %3 : vector<1x128xf32> to vector<208x128xf32>
    %5 = arith.addf %2, %4 : vector<208x128xf32>
    %cst_5 = arith.constant 0.000000e+00 : f32
    %6 = vector.broadcast %cst_5 : f32 to vector<208x128xf32>
    %7 = arith.maximumf %5, %6 : vector<208x128xf32>
    %8 = arith.truncf %7 : vector<208x128xf32> to vector<208x128xbf16>
    %c0_6 = arith.constant 0 : index
    %c0_7 = arith.constant 0 : index
    %9 = vector.load %arg4[%c0_6, %c0_7] : memref<128x128xbf16, #tpu.memory_space<vmem>>, vector<128x128xbf16>
    %cst_8 = arith.constant dense<0.000000e+00> : vector<208x128xf32>
    %10 = tpu.matmul %8, %9, %cst_8 {dimension_numbers = #tpu.dot_dimension_numbers<[1], [0], [0], [1], [0, 0, 1, 1], [], []>} : vector<208x128xbf16>, vector<128x128xbf16>, vector<208x128xf32> -> vector<208x128xf32>
    %c0_9 = arith.constant 0 : index
    %c0_10 = arith.constant 0 : index
    %11 = vector.load %arg5[%c0_9, %c0_10] : memref<1x128xf32, #tpu.memory_space<vmem>>, vector<1x128xf32>
    %12 = vector.broadcast %11 : vector<1x128xf32> to vector<208x128xf32>
    %13 = arith.addf %10, %12 : vector<208x128xf32>
    %c0_11 = arith.constant 0 : index
    %c0_12 = arith.constant 0 : index
    %14 = vector.load %arg6[%c0_11, %c0_12] : memref<208x128xf32, #tpu.memory_space<vmem>>, vector<208x128xf32>
    tpu.vector_store %arg6[%c0_11, %c0_12], %13 {strides = array<i32>} : memref<208x128xf32, #tpu.memory_space<vmem>>, vector<208x128xf32>,
    return
  }
  func.func @transform_0(%arg0: i32) -> (i32, i32) {
    %c0_i32 = arith.constant 0 : i32
    %c0_i32_0 = arith.constant 0 : i32
    return %arg0, %c0_i32 : i32, i32
  }
  func.func @transform_1(%arg0: i32) -> (i32, i32) {
    %c0_i32 = arith.constant 0 : i32
    %c0_i32_0 = arith.constant 0 : i32
    %c0_i32_1 = arith.constant 0 : i32
    return %c0_i32, %c0_i32_0 : i32, i32
  }
  func.func @transform_2(%arg0: i32) -> (i32, i32) {
    %c0_i32 = arith.constant 0 : i32
    %c0_i32_0 = arith.constant 0 : i32
    %c0_i32_1 = arith.constant 0 : i32
    return %c0_i32, %c0_i32_0 : i32, i32
  }
  func.func @transform_3(%arg0: i32) -> (i32, i32) {
    %c0_i32 = arith.constant 0 : i32
    %c0_i32_0 = arith.constant 0 : i32
    %c0_i32_1 = arith.constant 0 : i32
    return %c0_i32, %c0_i32_0 : i32, i32
  }
  func.func @transform_4(%arg0: i32) -> (i32, i32) {
    %c0_i32 = arith.constant 0 : i32
    %c0_i32_0 = arith.constant 0 : i32
    %c0_i32_1 = arith.constant 0 : i32
    return %c0_i32, %c0_i32_0 : i32, i32
  }
  func.func @transform_5(%arg0: i32) -> (i32, i32) {
    %c0_i32 = arith.constant 0 : i32
    %c0_i32_0 = arith.constant 0 : i32
    return %arg0, %c0_i32 : i32, i32
  }
}

</mosaic_0001>

<llo_original>
// kernel: neural_network_forward.1
$region0: #{neural_network_forward.1}
  #allocation0 [shape = 'u32[]', space=smem, size = 0x4, offset = 0x4, fixed_abs, tag = 'smem constant byte address 0x4 - core index']
  #allocation1 [shape = 'u32[144,128]{1,0:T(1,128)}', space=vmem, size = 0x12000, scoped, tag = 'internal scratch']
  %s0 = inlined_call_operand.vmem [shape: bf16[208,16], index: 0, kind: input, shape index: {}]
  %s1 = inlined_call_operand.vmem [shape: bf16[16,128], index: 1, kind: input, shape index: {}]
  %s2 = inlined_call_operand.vmem [shape: f32[1,128], index: 2, kind: input, shape index: {}]
  %s3 = inlined_call_operand.vmem [shape: bf16[128,128], index: 3, kind: input, shape index: {}]
  %s4 = inlined_call_operand.vmem [shape: f32[1,128], index: 4, kind: input, shape index: {}]
  %s5 = inlined_call_operand.vmem [shape: f32[208,128], index: 5, kind: output, shape index: {}]
  %s6 = sld [smem:[#allocation0]]
  $region30: #{neural_network_forward.1} parent=0
    _
  %s8 = ssub.s32 1, %s6
  %s9 = scalar_select 0, %s8, %s6
  // Predicated region
  $region2: #{neural_network_forward.1} parent=0 // pred_check
    _
  $region3: #{neural_network_forward.1} parent=0 // pred_check_branch
    %11 = sbr.rel (0) target = $region5
  $region4: #{neural_network_forward.1} parent=0 // pred_region
    _
  $region5: #{neural_network_forward.1} parent=0 // pred_fallthru
    _
  // Predicated region
  $region6: #{neural_network_forward.1} parent=0 // pred_check
    _
  $region7: #{neural_network_forward.1} parent=0 // pred_check_branch
    %13 = sbr.rel (0) target = $region9
  $region8: #{neural_network_forward.1} parent=0 // pred_region
    _
  $region9: #{neural_network_forward.1} parent=0 // pred_fallthru
    _
  // Predicated region
  $region10: #{neural_network_forward.1} parent=0 // pred_check
    _
  $region11: #{neural_network_forward.1} parent=0 // pred_check_branch
    %15 = sbr.rel (0) target = $region13
  $region12: #{neural_network_forward.1} parent=0 // pred_region
    _
  $region13: #{neural_network_forward.1} parent=0 // pred_fallthru
    _
  // Predicated region
  $region14: #{neural_network_forward.1} parent=0 // pred_check
    _
  $region15: #{neural_network_forward.1} parent=0 // pred_check_branch
    %17 = sbr.rel (0) target = $region17
  $region16: #{neural_network_forward.1} parent=0 // pred_region
    _
  $region17: #{neural_network_forward.1} parent=0 // pred_fallthru
    _
  // Predicated region
  $region18: #{neural_network_forward.1} parent=0 // pred_check
    _
  $region19: #{neural_network_forward.1} parent=0 // pred_check_branch
    %19 = sbr.rel (0) target = $region21
  $region20: #{neural_network_forward.1} parent=0 // pred_region
    _
  $region21: #{neural_network_forward.1} parent=0 // pred_fallthru
    _
  %v21 = vld [vmem:[%s0] sm:$0xf]
  %v22 = vld [vmem:[%s0 + $0x4] sm:$0xf]
  %v23 = vld [vmem:[%s0 + $0x8] sm:$0xf]
  %v24 = vld [vmem:[%s0 + $0xc] sm:$0xf]
  %v25 = vld [vmem:[%s0 + $0x10] sm:$0xf]
  %v26 = vld [vmem:[%s0 + $0x14] sm:$0xf]
  %v27 = vld [vmem:[%s0 + $0x18] sm:$0xf]
  %v28 = vld [vmem:[%s0 + $0x1c] sm:$0xf]
  %v29 = vld [vmem:[%s0 + $0x20] sm:$0xf]
  %v30 = vld [vmem:[%s0 + $0x24] sm:$0xf]
  %v31 = vld [vmem:[%s0 + $0x28] sm:$0xf]
  %v32 = vld [vmem:[%s0 + $0x2c] sm:$0xf]
  %v33 = vld [vmem:[%s0 + $0x30] sm:$0xf]
  %v34 = vld [vmem:[%s0 + $0x34] sm:$0xf]
  %v35 = vld [vmem:[%s0 + $0x38] sm:$0xf]
  %v36 = vld [vmem:[%s0 + $0x3c] sm:$0xf]
  %v37 = vld [vmem:[%s0 + $0x40] sm:$0xf]
  %v38 = vld [vmem:[%s0 + $0x44] sm:$0xf]
  %v39 = vld [vmem:[%s0 + $0x48] sm:$0xf]
  %v40 = vld [vmem:[%s0 + $0x4c] sm:$0xf]
  %v41 = vld [vmem:[%s0 + $0x50] sm:$0xf]
  %v42 = vld [vmem:[%s0 + $0x54] sm:$0xf]
  %v43 = vld [vmem:[%s0 + $0x58] sm:$0xf]
  %v44 = vld [vmem:[%s0 + $0x5c] sm:$0xf]
  %v45 = vld [vmem:[%s0 + $0x60] sm:$0xf]
  %v46 = vld [vmem:[%s0 + $0x64] sm:$0xf]
  %v47 = vld [vmem:[%s1] sm:$0xf]
  %v48 = vld [vmem:[%s1 + $0x4] sm:$0xf]
  %v49 = vld [vmem:[%s2] sm:$0x1]
  %v51 = vlaneseq
  %v52 = vshrl.u32 %v51, 7
  %v53 = vsub.s32 0, %v52
  %v54 = vrot.slane %v49, %v53
  %v82 = vunpack.c.l.b16 %v21
  %v83 = vunpack.c.l.b16 %v22
  %v84 = vunpack.c.l.b16 %v23
  %v85 = vunpack.c.l.b16 %v24
  %v86 = vunpack.c.l.b16 %v25
  %v87 = vunpack.c.l.b16 %v26
  %v88 = vunpack.c.l.b16 %v27
  %v89 = vunpack.c.l.b16 %v28
  %v90 = vunpack.c.l.b16 %v29
  %v91 = vunpack.c.l.b16 %v30
  %v92 = vunpack.c.l.b16 %v31
  %v93 = vunpack.c.l.b16 %v32
  %v94 = vunpack.c.l.b16 %v33
  %v95 = vunpack.c.l.b16 %v34
  %v96 = vunpack.c.l.b16 %v35
  %v97 = vunpack.c.l.b16 %v36
  %v98 = vunpack.c.l.b16 %v37
  %v99 = vunpack.c.l.b16 %v38
  %v100 = vunpack.c.l.b16 %v39
  %v101 = vunpack.c.l.b16 %v40
  %v102 = vunpack.c.l.b16 %v41
  %v103 = vunpack.c.l.b16 %v42
  %v104 = vunpack.c.l.b16 %v43
  %v105 = vunpack.c.l.b16 %v44
  %v106 = vunpack.c.l.b16 %v45
  %v107 = vunpack.c.l.b16 %v46
  %v108 = vpack.c.b16 %v83, %v82
  %v109 = vpack.c.b16 %v85, %v84
  %v110 = vpack.c.b16 %v87, %v86
  %v111 = vpack.c.b16 %v89, %v88
  %v112 = vpack.c.b16 %v91, %v90
  %v113 = vpack.c.b16 %v93, %v92
  %v114 = vpack.c.b16 %v95, %v94
  %v115 = vpack.c.b16 %v97, %v96
  %v116 = vpack.c.b16 %v99, %v98
  %v117 = vpack.c.b16 %v101, %v100
  %v118 = vpack.c.b16 %v103, %v102
  %v119 = vpack.c.b16 %v105, %v104
  %v120 = vpack.c.b16 %v107, %v106
  %v123 = vunpack.c.l.b16 %v47
  %v124 = vunpack.c.l.b16 %v48
  %v125 = vpack.c.b16 %v124, %v123
  %vm127 = vcmask 130048
  %v129 = vsel %vm127, %v108, 0
  %v132 = vsel %vm127, %v109, 0
  %v135 = vsel %vm127, %v110, 0
  %v138 = vsel %vm127, %v111, 0
  %v141 = vsel %vm127, %v112, 0
  %v144 = vsel %vm127, %v113, 0
  %v147 = vsel %vm127, %v114, 0
  %v150 = vsel %vm127, %v115, 0
  %v153 = vsel %vm127, %v116, 0
  %v156 = vsel %vm127, %v117, 0
  %v159 = vsel %vm127, %v118, 0
  %v162 = vsel %vm127, %v119, 0
  %v165 = vsel %vm127, %v120, 0
  %167 = vmatprep.subr.bf16.mxu0 0
  %168 = vmatpush1.bf16.msra.mxu0 %v125
  %169 = vmatprep.subr.bf16.mxu0 0
  %170 = vmatpush1.bf16.msra.mxu0 0
  %171 = vmatprep.subr.bf16.mxu0 0
  %172 = vmatpush1.bf16.msra.mxu0 0
  %173 = vmatprep.subr.bf16.mxu0 0
  %174 = vmatpush1.bf16.msra.mxu0 0
  %175 = vmatprep.subr.bf16.mxu0 0
  %176 = vmatpush1.bf16.msra.mxu0 0
  %177 = vmatprep.subr.bf16.mxu0 0
  %178 = vmatpush1.bf16.msra.mxu0 0
  %179 = vmatprep.subr.bf16.mxu0 0
  %180 = vmatpush1.bf16.msra.mxu0 0
  %181 = vmatprep.subr.bf16.mxu0 0
  %182 = vmatpush1.bf16.msra.mxu0 0
  %183 = vmatprep.subr.bf16.mxu0 0
  %184 = vmatpush1.bf16.msra.mxu0 0
  %185 = vmatprep.subr.bf16.mxu0 0
  %186 = vmatpush1.bf16.msra.mxu0 0
  %187 = vmatprep.subr.bf16.mxu0 0
  %188 = vmatpush1.bf16.msra.mxu0 0
  %189 = vmatprep.subr.bf16.mxu0 0
  %190 = vmatpush1.bf16.msra.mxu0 0
  %191 = vmatprep.subr.bf16.mxu0 0
  %192 = vmatpush1.bf16.msra.mxu0 0
  %193 = vmatprep.subr.bf16.mxu0 0
  %194 = vmatpush1.bf16.msra.mxu0 0
  %195 = vmatprep.subr.bf16.mxu0 0
  %196 = vmatpush1.bf16.msra.mxu0 0
  %197 = vmatprep.subr.bf16.mxu0 0
  %198 = vmatpush1.bf16.msra.mxu0 0
  %199 = vmatprep.mubr.bf16.mxu0 0
  %200 = vmatmul.mubr.bf16.gmra.mrb[0].mxu0 %v129
  %v201 = vpop.f32.mrb[0].mxu0
  %v202 = vadd.f32 %v54, %v201
  %v203 = vpop.f32.mrb[0].mxu0
  %v204 = vpop.f32.mrb[0].mxu0
  %v205 = vadd.f32 %v54, %v204
  %v206 = vpop.f32.mrb[0].mxu0
  %207 = vmatprep.mubr.bf16.mxu0 0
  %208 = vmatmul.mubr.bf16.gmra.mrb[0].mxu0 %v132
  %v209 = vpop.f32.mrb[0].mxu0
  %v210 = vadd.f32 %v54, %v209
  %v211 = vpop.f32.mrb[0].mxu0
  %v212 = vpop.f32.mrb[0].mxu0
  %v213 = vadd.f32 %v54, %v212
  %v214 = vpop.f32.mrb[0].mxu0
  %215 = vmatprep.mubr.bf16.mxu0 0
  %216 = vmatmul.mubr.bf16.gmra.mrb[0].mxu0 %v135
  %v217 = vpop.f32.mrb[0].mxu0
  %v218 = vadd.f32 %v54, %v217
  %v219 = vpop.f32.mrb[0].mxu0
  %v220 = vpop.f32.mrb[0].mxu0
  %v221 = vadd.f32 %v54, %v220
  %v222 = vpop.f32.mrb[0].mxu0
  %223 = vmatprep.mubr.bf16.mxu0 0
  %224 = vmatmul.mubr.bf16.gmra.mrb[0].mxu0 %v138
  %v225 = vpop.f32.mrb[0].mxu0
  %v226 = vadd.f32 %v54, %v225
  %v227 = vpop.f32.mrb[0].mxu0
  %v228 = vpop.f32.mrb[0].mxu0
  %v229 = vadd.f32 %v54, %v228
  %v230 = vpop.f32.mrb[0].mxu0
  %231 = vmatprep.mubr.bf16.mxu0 0
  %232 = vmatmul.mubr.bf16.gmra.mrb[0].mxu0 %v141
  %v233 = vpop.f32.mrb[0].mxu0
  %v234 = vadd.f32 %v54, %v233
  %v235 = vpop.f32.mrb[0].mxu0
  %v236 = vpop.f32.mrb[0].mxu0
  %v237 = vadd.f32 %v54, %v236
  %v238 = vpop.f32.mrb[0].mxu0
  %239 = vmatprep.mubr.bf16.mxu0 0
  %240 = vmatmul.mubr.bf16.gmra.mrb[0].mxu0 %v144
  %v241 = vpop.f32.mrb[0].mxu0
  %v242 = vadd.f32 %v54, %v241
  %v243 = vpop.f32.mrb[0].mxu0
  %v244 = vpop.f32.mrb[0].mxu0
  %v245 = vadd.f32 %v54, %v244
  %v246 = vpop.f32.mrb[0].mxu0
  %247 = vmatprep.mubr.bf16.mxu0 0
  %248 = vmatmul.mubr.bf16.gmra.mrb[0].mxu0 %v147
  %v249 = vpop.f32.mrb[0].mxu0
  %v250 = vadd.f32 %v54, %v249
  %v251 = vpop.f32.mrb[0].mxu0
  %v252 = vpop.f32.mrb[0].mxu0
  %v253 = vadd.f32 %v54, %v252
  %v254 = vpop.f32.mrb[0].mxu0
  %255 = vmatprep.mubr.bf16.mxu0 0
  %256 = vmatmul.mubr.bf16.gmra.mrb[0].mxu0 %v150
  %v257 = vpop.f32.mrb[0].mxu0
  %v258 = vadd.f32 %v54, %v257
  %v259 = vpop.f32.mrb[0].mxu0
  %v260 = vpop.f32.mrb[0].mxu0
  %v261 = vadd.f32 %v54, %v260
  %v262 = vpop.f32.mrb[0].mxu0
  %263 = vmatprep.mubr.bf16.mxu0 0
  %264 = vmatmul.mubr.bf16.gmra.mrb[0].mxu0 %v153
  %v265 = vpop.f32.mrb[0].mxu0
  %v266 = vadd.f32 %v54, %v265
  %v267 = vpop.f32.mrb[0].mxu0
  %v268 = vpop.f32.mrb[0].mxu0
  %v269 = vadd.f32 %v54, %v268
  %v270 = vpop.f32.mrb[0].mxu0
  %271 = vmatprep.mubr.bf16.mxu0 0
  %272 = vmatmul.mubr.bf16.gmra.mrb[0].mxu0 %v156
  %v273 = vpop.f32.mrb[0].mxu0
  %v274 = vadd.f32 %v54, %v273
  %v275 = vpop.f32.mrb[0].mxu0
  %v276 = vpop.f32.mrb[0].mxu0
  %v277 = vadd.f32 %v54, %v276
  %v278 = vpop.f32.mrb[0].mxu0
  %279 = vmatprep.mubr.bf16.mxu0 0
  %280 = vmatmul.mubr.bf16.gmra.mrb[0].mxu0 %v159
  %v281 = vpop.f32.mrb[0].mxu0
  %v282 = vadd.f32 %v54, %v281
  %v283 = vpop.f32.mrb[0].mxu0
  %v284 = vpop.f32.mrb[0].mxu0
  %v285 = vadd.f32 %v54, %v284
  %v286 = vpop.f32.mrb[0].mxu0
  %287 = vmatprep.mubr.bf16.mxu0 0
  %288 = vmatmul.mubr.bf16.gmra.mrb[0].mxu0 %v162
  %v289 = vpop.f32.mrb[0].mxu0
  %v290 = vadd.f32 %v54, %v289
  %v291 = vpop.f32.mrb[0].mxu0
  %v292 = vpop.f32.mrb[0].mxu0
  %v293 = vadd.f32 %v54, %v292
  %v294 = vpop.f32.mrb[0].mxu0
  %295 = vmatprep.mubr.bf16.mxu0 0
  %296 = vmatmul.mubr.bf16.gmra.mrb[0].mxu0 %v165
  %v297 = vpop.f32.mrb[0].mxu0
  %v298 = vadd.f32 %v54, %v297
  %v299 = vpop.f32.mrb[0].mxu0
  %v300 = vpop.f32.mrb[0].mxu0
  %v301 = vadd.f32 %v54, %v300
  %v302 = vpop.f32.mrb[0].mxu0
  %303 = vdwg.mxu0
  %v304 = vmax.f32 %v202, 0.0
  %v305 = vmax.f32 %v205, 0.0
  %v306 = vmax.f32 %v210, 0.0
  %v307 = vmax.f32 %v213, 0.0
  %v308 = vmax.f32 %v218, 0.0
  %v309 = vmax.f32 %v221, 0.0
  %v310 = vmax.f32 %v226, 0.0
  %v311 = vmax.f32 %v229, 0.0
  %v312 = vmax.f32 %v234, 0.0
  %v313 = vmax.f32 %v237, 0.0
  %v314 = vmax.f32 %v242, 0.0
  %v315 = vmax.f32 %v245, 0.0
  %v316 = vmax.f32 %v250, 0.0
  %v317 = vmax.f32 %v253, 0.0
  %v318 = vmax.f32 %v258, 0.0
  %v319 = vmax.f32 %v261, 0.0
  %v320 = vmax.f32 %v266, 0.0
  %v321 = vmax.f32 %v269, 0.0
  %v322 = vmax.f32 %v274, 0.0
  %v323 = vmax.f32 %v277, 0.0
  %v324 = vmax.f32 %v282, 0.0
  %v325 = vmax.f32 %v285, 0.0
  %v326 = vmax.f32 %v290, 0.0
  %v327 = vmax.f32 %v293, 0.0
  %v328 = vmax.f32 %v298, 0.0
  %v329 = vmax.f32 %v301, 0.0
  %v330 = vpack.c.bf16 %v305, %v304
  %v331 = vpack.c.bf16 %v307, %v306
  %v332 = vpack.c.bf16 %v309, %v308
  %v333 = vpack.c.bf16 %v311, %v310
  %v334 = vpack.c.bf16 %v313, %v312
  %v335 = vpack.c.bf16 %v315, %v314
  %v336 = vpack.c.bf16 %v317, %v316
  %v337 = vpack.c.bf16 %v319, %v318
  %v338 = vpack.c.bf16 %v321, %v320
  %v339 = vpack.c.bf16 %v323, %v322
  %v340 = vpack.c.bf16 %v325, %v324
  %v341 = vpack.c.bf16 %v327, %v326
  %v342 = vpack.c.bf16 %v329, %v328
  %v343 = vld [vmem:[%s3] sm:$0xf]
  %v344 = vld [vmem:[%s3 + $0x4] sm:$0xf]
  %v345 = vld [vmem:[%s3 + $0x8] sm:$0xf]
  %v346 = vld [vmem:[%s3 + $0xc] sm:$0xf]
  %v347 = vld [vmem:[%s3 + $0x10] sm:$0xf]
  %v348 = vld [vmem:[%s3 + $0x14] sm:$0xf]
  %v349 = vld [vmem:[%s3 + $0x18] sm:$0xf]
  %v350 = vld [vmem:[%s3 + $0x1c] sm:$0xf]
  %v351 = vld [vmem:[%s3 + $0x20] sm:$0xf]
  %v352 = vld [vmem:[%s3 + $0x24] sm:$0xf]
  %v353 = vld [vmem:[%s3 + $0x28] sm:$0xf]
  %v354 = vld [vmem:[%s3 + $0x2c] sm:$0xf]
  %v355 = vld [vmem:[%s3 + $0x30] sm:$0xf]
  %v356 = vld [vmem:[%s3 + $0x34] sm:$0xf]
  %v357 = vld [vmem:[%s3 + $0x38] sm:$0xf]
  %v358 = vld [vmem:[%s3 + $0x3c] sm:$0xf]
  %v359 = vld [vmem:[%s4] sm:$0x1]
  %v361 = vlaneseq
  %v362 = vshrl.u32 %v361, 7
  %v363 = vsub.s32 0, %v362
  %v364 = vrot.slane %v359, %v363
  %v382 = vunpack.c.l.b16 %v343
  %v383 = vunpack.c.l.b16 %v344
  %v384 = vunpack.c.l.b16 %v345
  %v385 = vunpack.c.l.b16 %v346
  %v386 = vunpack.c.l.b16 %v347
  %v387 = vunpack.c.l.b16 %v348
  %v388 = vunpack.c.l.b16 %v349
  %v389 = vunpack.c.l.b16 %v350
  %v390 = vunpack.c.l.b16 %v351
  %v391 = vunpack.c.l.b16 %v352
  %v392 = vunpack.c.l.b16 %v353
  %v393 = vunpack.c.l.b16 %v354
  %v394 = vunpack.c.l.b16 %v355
  %v395 = vunpack.c.l.b16 %v356
  %v396 = vunpack.c.l.b16 %v357
  %v397 = vunpack.c.l.b16 %v358
  %v398 = vpack.c.b16 %v383, %v382
  %v399 = vpack.c.b16 %v385, %v384
  %v400 = vpack.c.b16 %v387, %v386
  %v401 = vpack.c.b16 %v389, %v388
  %v402 = vpack.c.b16 %v391, %v390
  %v403 = vpack.c.b16 %v393, %v392
  %v404 = vpack.c.b16 %v395, %v394
  %v405 = vpack.c.b16 %v397, %v396
  %414 = vmatprep.subr.bf16.mxu0 0
  %415 = vmatpush1.bf16.msra.mxu0 %v398
  %416 = vmatprep.subr.bf16.mxu0 0
  %417 = vmatpush1.bf16.msra.mxu0 %v399
  %418 = vmatprep.subr.bf16.mxu0 0
  %419 = vmatpush1.bf16.msra.mxu0 %v400
  %420 = vmatprep.subr.bf16.mxu0 0
  %421 = vmatpush1.bf16.msra.mxu0 %v401
  %422 = vmatprep.subr.bf16.mxu0 0
  %423 = vmatpush1.bf16.msra.mxu0 %v402
  %424 = vmatprep.subr.bf16.mxu0 0
  %425 = vmatpush1.bf16.msra.mxu0 %v403
  %426 = vmatprep.subr.bf16.mxu0 0
  %427 = vmatpush1.bf16.msra.mxu0 %v404
  %428 = vmatprep.subr.bf16.mxu0 0
  %429 = vmatpush1.bf16.msra.mxu0 %v405
  %430 = vmatprep.subr.bf16.mxu0 0
  %431 = vmatpush1.bf16.msra.mxu0 0
  %432 = vmatprep.subr.bf16.mxu0 0
  %433 = vmatpush1.bf16.msra.mxu0 0
  %434 = vmatprep.subr.bf16.mxu0 0
  %435 = vmatpush1.bf16.msra.mxu0 0
  %436 = vmatprep.subr.bf16.mxu0 0
  %437 = vmatpush1.bf16.msra.mxu0 0
  %438 = vmatprep.subr.bf16.mxu0 0
  %439 = vmatpush1.bf16.msra.mxu0 0
  %440 = vmatprep.subr.bf16.mxu0 0
  %441 = vmatpush1.bf16.msra.mxu0 0
  %442 = vmatprep.subr.bf16.mxu0 0
  %443 = vmatpush1.bf16.msra.mxu0 0
  %444 = vmatprep.subr.bf16.mxu0 0
  %445 = vmatpush1.bf16.msra.mxu0 0
  %446 = vmatprep.mubr.bf16.mxu0 0
  %447 = vmatmul.mubr.bf16.gmra.mrb[0].mxu0 %v330
  %v448 = vpop.f32.mrb[0].mxu0
  %v449 = vadd.f32 %v364, %v448
  %v450 = vpop.f32.mrb[0].mxu0
  %v451 = vpop.f32.mrb[0].mxu0
  %v452 = vadd.f32 %v364, %v451
  %v453 = vpop.f32.mrb[0].mxu0
  %454 = vmatprep.mubr.bf16.mxu0 0
  %455 = vmatmul.mubr.bf16.gmra.mrb[0].mxu0 %v331
  %v456 = vpop.f32.mrb[0].mxu0
  %v457 = vadd.f32 %v364, %v456
  %v458 = vpop.f32.mrb[0].mxu0
  %v459 = vpop.f32.mrb[0].mxu0
  %v460 = vadd.f32 %v364, %v459
  %v461 = vpop.f32.mrb[0].mxu0
  %462 = vmatprep.mubr.bf16.mxu0 0
  %463 = vmatmul.mubr.bf16.gmra.mrb[0].mxu0 %v332
  %v464 = vpop.f32.mrb[0].mxu0
  %v465 = vadd.f32 %v364, %v464
  %v466 = vpop.f32.mrb[0].mxu0
  %v467 = vpop.f32.mrb[0].mxu0
  %v468 = vadd.f32 %v364, %v467
  %v469 = vpop.f32.mrb[0].mxu0
  %470 = vmatprep.mubr.bf16.mxu0 0
  %471 = vmatmul.mubr.bf16.gmra.mrb[0].mxu0 %v333
  %v472 = vpop.f32.mrb[0].mxu0
  %v473 = vadd.f32 %v364, %v472
  %v474 = vpop.f32.mrb[0].mxu0
  %v475 = vpop.f32.mrb[0].mxu0
  %v476 = vadd.f32 %v364, %v475
  %v477 = vpop.f32.mrb[0].mxu0
  %478 = vmatprep.mubr.bf16.mxu0 0
  %479 = vmatmul.mubr.bf16.gmra.mrb[0].mxu0 %v334
  %v480 = vpop.f32.mrb[0].mxu0
  %v481 = vadd.f32 %v364, %v480
  %v482 = vpop.f32.mrb[0].mxu0
  %v483 = vpop.f32.mrb[0].mxu0
  %v484 = vadd.f32 %v364, %v483
  %v485 = vpop.f32.mrb[0].mxu0
  %486 = vmatprep.mubr.bf16.mxu0 0
  %487 = vmatmul.mubr.bf16.gmra.mrb[0].mxu0 %v335
  %v488 = vpop.f32.mrb[0].mxu0
  %v489 = vadd.f32 %v364, %v488
  %v490 = vpop.f32.mrb[0].mxu0
  %v491 = vpop.f32.mrb[0].mxu0
  %v492 = vadd.f32 %v364, %v491
  %v493 = vpop.f32.mrb[0].mxu0
  %494 = vmatprep.mubr.bf16.mxu0 0
  %495 = vmatmul.mubr.bf16.gmra.mrb[0].mxu0 %v336
  %v496 = vpop.f32.mrb[0].mxu0
  %v497 = vadd.f32 %v364, %v496
  %v498 = vpop.f32.mrb[0].mxu0
  %v499 = vpop.f32.mrb[0].mxu0
  %v500 = vadd.f32 %v364, %v499
  %v501 = vpop.f32.mrb[0].mxu0
  %502 = vmatprep.mubr.bf16.mxu0 0
  %503 = vmatmul.mubr.bf16.gmra.mrb[0].mxu0 %v337
  %v504 = vpop.f32.mrb[0].mxu0
  %v505 = vadd.f32 %v364, %v504
  %v506 = vpop.f32.mrb[0].mxu0
  %v507 = vpop.f32.mrb[0].mxu0
  %v508 = vadd.f32 %v364, %v507
  %v509 = vpop.f32.mrb[0].mxu0
  %510 = vmatprep.mubr.bf16.mxu0 0
  %511 = vmatmul.mubr.bf16.gmra.mrb[0].mxu0 %v338
  %v512 = vpop.f32.mrb[0].mxu0
  %v513 = vadd.f32 %v364, %v512
  %v514 = vpop.f32.mrb[0].mxu0
  %v515 = vpop.f32.mrb[0].mxu0
  %v516 = vadd.f32 %v364, %v515
  %v517 = vpop.f32.mrb[0].mxu0
  %518 = vmatprep.mubr.bf16.mxu0 0
  %519 = vmatmul.mubr.bf16.gmra.mrb[0].mxu0 %v339
  %v520 = vpop.f32.mrb[0].mxu0
  %v521 = vadd.f32 %v364, %v520
  %v522 = vpop.f32.mrb[0].mxu0
  %v523 = vpop.f32.mrb[0].mxu0
  %v524 = vadd.f32 %v364, %v523
  %v525 = vpop.f32.mrb[0].mxu0
  %526 = vmatprep.mubr.bf16.mxu0 0
  %527 = vmatmul.mubr.bf16.gmra.mrb[0].mxu0 %v340
  %v528 = vpop.f32.mrb[0].mxu0
  %v529 = vadd.f32 %v364, %v528
  %v530 = vpop.f32.mrb[0].mxu0
  %v531 = vpop.f32.mrb[0].mxu0
  %v532 = vadd.f32 %v364, %v531
  %v533 = vpop.f32.mrb[0].mxu0
  %534 = vmatprep.mubr.bf16.mxu0 0
  %535 = vmatmul.mubr.bf16.gmra.mrb[0].mxu0 %v341
  %v536 = vpop.f32.mrb[0].mxu0
  %v537 = vadd.f32 %v364, %v536
  %v538 = vpop.f32.mrb[0].mxu0
  %v539 = vpop.f32.mrb[0].mxu0
  %v540 = vadd.f32 %v364, %v539
  %v541 = vpop.f32.mrb[0].mxu0
  %542 = vmatprep.mubr.bf16.mxu0 0
  %543 = vmatmul.mubr.bf16.gmra.mrb[0].mxu0 %v342
  %v544 = vpop.f32.mrb[0].mxu0
  %v545 = vadd.f32 %v364, %v544
  %v546 = vpop.f32.mrb[0].mxu0
  %v547 = vpop.f32.mrb[0].mxu0
  %v548 = vadd.f32 %v364, %v547
  %v549 = vpop.f32.mrb[0].mxu0
  %550 = vdwg.mxu0
  %551 = vst [vmem:[%s5] sm:$0xff] %v449
  %552 = vst [vmem:[%s5 + $0x8] sm:$0xff] %v452
  %553 = vst [vmem:[%s5 + $0x10] sm:$0xff] %v457
  %554 = vst [vmem:[%s5 + $0x18] sm:$0xff] %v460
  %555 = vst [vmem:[%s5 + $0x20] sm:$0xff] %v465
  %556 = vst [vmem:[%s5 + $0x28] sm:$0xff] %v468
  %557 = vst [vmem:[%s5 + $0x30] sm:$0xff] %v473
  %558 = vst [vmem:[%s5 + $0x38] sm:$0xff] %v476
  %559 = vst [vmem:[%s5 + $0x40] sm:$0xff] %v481
  %560 = vst [vmem:[%s5 + $0x48] sm:$0xff] %v484
  %561 = vst [vmem:[%s5 + $0x50] sm:$0xff] %v489
  %562 = vst [vmem:[%s5 + $0x58] sm:$0xff] %v492
  %563 = vst [vmem:[%s5 + $0x60] sm:$0xff] %v497
  %564 = vst [vmem:[%s5 + $0x68] sm:$0xff] %v500
  %565 = vst [vmem:[%s5 + $0x70] sm:$0xff] %v505
  %566 = vst [vmem:[%s5 + $0x78] sm:$0xff] %v508
  %567 = vst [vmem:[%s5 + $0x80] sm:$0xff] %v513
  %568 = vst [vmem:[%s5 + $0x88] sm:$0xff] %v516
  %569 = vst [vmem:[%s5 + $0x90] sm:$0xff] %v521
  %570 = vst [vmem:[%s5 + $0x98] sm:$0xff] %v524
  %571 = vst [vmem:[%s5 + $0xa0] sm:$0xff] %v529
  %572 = vst [vmem:[%s5 + $0xa8] sm:$0xff] %v532
  %573 = vst [vmem:[%s5 + $0xb0] sm:$0xff] %v537
  %574 = vst [vmem:[%s5 + $0xb8] sm:$0xff] %v540
  %575 = vst [vmem:[%s5 + $0xc0] sm:$0xff] %v545
  %576 = vst [vmem:[%s5 + $0xc8] sm:$0xff] %v548
  // Predicated region
  $region22: #{neural_network_forward.1} parent=0 // pred_check
    _
  $region23: #{neural_network_forward.1} parent=0 // pred_check_branch
    %578 = sbr.rel (0) target = $region25
  $region24: #{neural_network_forward.1} parent=0 // pred_region
    _
  $region25: #{neural_network_forward.1} parent=0 // pred_fallthru
    _
  // Predicated region
  $region26: #{neural_network_forward.1} parent=0 // pred_check
    _
  $region27: #{neural_network_forward.1} parent=0 // pred_check_branch
    %580 = sbr.rel (0) target = $region29
  $region28: #{neural_network_forward.1} parent=0 // pred_region
    _
  $region29: #{neural_network_forward.1} parent=0 // pred_fallthru
    _

</llo_original>
